<compile_context>
chip_gen: v7x
topology: tpu7x:2x2x1
jax: 0.10.0
libtpu: 0.0.40
codegen_flags: <defaults>
</compile_context>

<pallas_src>
import math

import jax
import jax.numpy as jnp
from jax import lax
from jax.experimental import pallas as pl
from jax.experimental.pallas import tpu as pltpu


def _round_up(x, m):
    return (x + m - 1) // m * m


def _choose_time_chunk(T, target):
    """Largest chunk <= target that evenly divides T (so no ragged blocks)."""
    tc = min(T, target)
    while T % tc != 0:
        tc -= 1
    return tc


def _rnn_kernel(p1_ref,            # (Tc, Bp, Hp)  pre-projected layer-1 input (+ biases)
                whh1_ref,          # (Hp, Hp)      W_hh1^T (padded)
                w2_ref,            # (2*Hp, Hp)    [W_ih2^T ; W_hh2^T] (padded)
                b2_ref,            # (Bp, Hp)      b_ih2 + b_hh2, pre-broadcast over batch
                wfc_ref,           # (Hp, Op)      W_fc^T (padded)
                bfc_ref,           # (Bp, Op)      b_fc, pre-broadcast over batch
                out_ref,           # (Bp, Op)
                h1_scr, h2_scr):   # VMEM scratch (Bp, Hp), persists across grid steps
    chunk = pl.program_id(0)
    n_chunks = pl.num_programs(0)
    Tc = p1_ref.shape[0]

    # h0 = 0 for both RNN layers (matches the PyTorch forward()).
    @pl.when(chunk == 0)
    def _():
        h1_scr[...] = jnp.zeros_like(h1_scr)
        h2_scr[...] = jnp.zeros_like(h2_scr)

    whh1 = whh1_ref[...]
    w2 = w2_ref[...]
    b2 = b2_ref[...]

    def step(t, carry):
        h1, h2 = carry
        # layer 1: h1_t = tanh(P1[t] + h1_{t-1} @ W_hh1^T)   (input proj hoisted)
        h1 = jnp.tanh(p1_ref[t]
                      + jnp.dot(h1, whh1, preferred_element_type=jnp.float32))
        # inter-layer ReLU
        a1 = jnp.maximum(h1, 0.0)
        # layer 2 (fused ih/hh matmul): h2_t = tanh([a1, h2_{t-1}] @ W2 + b2)
        z = jnp.concatenate([a1, h2], axis=1)          # (Bp, 2*Hp)
        h2 = jnp.tanh(jnp.dot(z, w2, preferred_element_type=jnp.float32) + b2)
        return (h1, h2)

    # Hidden state lives in vregs inside the chunk; VMEM round-trip once per chunk.
    h1_f, h2_f = lax.fori_loop(0, Tc, step, (h1_scr[...], h2_scr[...]),
                               unroll=True)
    h1_scr[...] = h1_f
    h2_scr[...] = h2_f

    # Final step only: out = sigmoid(fc(relu(h2_T)))
    @pl.when(chunk == n_chunks - 1)
    def _():
        a2 = jnp.maximum(h2_f, 0.0)
        logits = (jnp.dot(a2, wfc_ref[...], preferred_element_type=jnp.float32)
                  + bfc_ref[...])
        out_ref[...] = jax.nn.sigmoid(logits)


def rnn_forward(x, params, *, time_chunk=32):
    """x: (B, T, input_size), batch-first like the PyTorch module. Returns (B, O) f32."""
    B, T, I = x.shape
    H = params["w_ih1"].shape[0]
    O = params["w_fc"].shape[0]

    Bp = _round_up(B, 8)      # sublane-dense
    Hp = _round_up(H, 128)    # lane-dense
    Op = _round_up(O, 128)    # lane-dense output -> unmasked stores
    Tc = _choose_time_chunk(T, time_chunk)
    n_chunks = T // Tc

    x = x.astype(jnp.float32)

    # --- Hoisted layer-1 input projection (one big matmul, outside the recurrence) ---
    # P1[b, t, :] = x[b, t, :] @ W_ih1^T + (b_ih1 + b_hh1)
    p1 = jnp.einsum("bti,hi->bth", x, params["w_ih1"]) \
        + (params["b_ih1"] + params["b_hh1"])
    p1 = jnp.transpose(p1, (1, 0, 2))                                   # (T, B, H)
    p1_pad = jnp.zeros((T, Bp, Hp), jnp.float32).at[:, :B, :H].set(p1)

    # --- Resident, padded weights / biases ---
    whh1 = jnp.zeros((Hp, Hp), jnp.float32).at[:H, :H].set(params["w_hh1"].T)

    w2 = jnp.zeros((2 * Hp, Hp), jnp.float32)
    w2 = w2.at[:H, :H].set(params["w_ih2"].T)            # rows for a1 lanes [0, Hp)
    w2 = w2.at[Hp:Hp + H, :H].set(params["w_hh2"].T)     # rows for h2 lanes [Hp, 2Hp)

    b2 = jnp.zeros((Bp, Hp), jnp.float32).at[:, :H].set(
        jnp.broadcast_to(params["b_ih2"] + params["b_hh2"], (Bp, H)))

    wfc = jnp.zeros((Hp, Op), jnp.float32).at[:H, :O].set(params["w_fc"].T)
    bfc = jnp.zeros((Bp, Op), jnp.float32).at[:, :O].set(
        jnp.broadcast_to(params["b_fc"], (Bp, O)))

    resident2d = lambda r, c: pl.BlockSpec((r, c), lambda t: (0, 0))

    flops = 2 * T * Bp * (Hp * Hp + 2 * Hp * Hp) + 2 * Bp * Hp * Op
    transcendentals = 2 * T * Bp * Hp + Bp * Op
    bytes_accessed = (p1_pad.size + whh1.size + w2.size + b2.size
                      + wfc.size + bfc.size + Bp * Op) * 4

    out_pad = pl.pallas_call(
        _rnn_kernel,
        grid=(n_chunks,),
        in_specs=[
            pl.BlockSpec((Tc, Bp, Hp), lambda t: (t, 0, 0)),   # streamed over time
            resident2d(Hp, Hp),
            resident2d(2 * Hp, Hp),
            resident2d(Bp, Hp),
            resident2d(Hp, Op),
            resident2d(Bp, Op),
        ],
        out_specs=pl.BlockSpec((Bp, Op), lambda t: (0, 0)),    # resident across chunks
        out_shape=jax.ShapeDtypeStruct((Bp, Op), jnp.float32),
        scratch_shapes=[
            pltpu.VMEM((Bp, Hp), jnp.float32),
            pltpu.VMEM((Bp, Hp), jnp.float32),
        ],
        compiler_params=pltpu.CompilerParams(
            dimension_semantics=("arbitrary",),               # sequential recurrence
        ),
        cost_estimate=pl.CostEstimate(flops=flops,
                                      transcendentals=transcendentals,
                                      bytes_accessed=bytes_accessed),
    )(p1_pad, whh1, w2, b2, wfc, bfc)

    return out_pad[:B, :O]


def xavier_uniform(key, shape):
    fan_out, fan_in = shape  # PyTorch weight layout: (out_features, in_features)
    bound = (6.0 / (fan_in + fan_out)) ** 0.5
    return jax.random.uniform(key, shape, jnp.float32, -bound, bound)


def init_params(key, input_size, hidden_size, output_size):
    ks = jax.random.split(key, 5)
    return {
        "w_ih1": xavier_uniform(ks[0], (hidden_size, input_size)),
        "w_hh1": xavier_uniform(ks[1], (hidden_size, hidden_size)),
        "b_ih1": jnp.zeros((hidden_size,), jnp.float32),
        "b_hh1": jnp.zeros((hidden_size,), jnp.float32),
        "w_ih2": xavier_uniform(ks[2], (hidden_size, hidden_size)),
        "w_hh2": xavier_uniform(ks[3], (hidden_size, hidden_size)),
        "b_ih2": jnp.zeros((hidden_size,), jnp.float32),
        "b_hh2": jnp.zeros((hidden_size,), jnp.float32),
        "w_fc": xavier_uniform(ks[4], (output_size, hidden_size)),
        "b_fc": jnp.zeros((output_size,), jnp.float32),
    }


def reference_forward(x, p):
    """Pure-JAX reference matching the PyTorch module's semantics."""
    B, T, I = x.shape
    H = p["w_ih1"].shape[0]

    def layer(inp, w_ih, w_hh, b_ih, b_hh):
        def step(h, x_t):
            h_new = jnp.tanh(x_t @ w_ih.T + b_ih + h @ w_hh.T + b_hh)
            return h_new, h_new
        _, hs = lax.scan(step, jnp.zeros((B, H), jnp.float32),
                         jnp.transpose(inp, (1, 0, 2)))
        return jnp.transpose(hs, (1, 0, 2))

    out1 = jax.nn.relu(layer(x, p["w_ih1"], p["w_hh1"], p["b_ih1"], p["b_hh1"]))
    out2 = jax.nn.relu(layer(out1, p["w_ih2"], p["w_hh2"], p["b_ih2"], p["b_hh2"]))
    return jax.nn.sigmoid(out2[:, -1, :] @ p["w_fc"].T + p["b_fc"])


if __name__ == "__main__":
    B, T, INPUT, HIDDEN, OUTPUT = 2, 8, 4, 32, 3
    key = jax.random.PRNGKey(0)
    kx, kp = jax.random.split(key)
    x = jax.random.normal(kx, (B, T, INPUT), jnp.float32)
    params = init_params(kp, INPUT, HIDDEN, OUTPUT)

    # time_chunk=4 -> grid=(2,) so the cross-chunk hidden-state carry path is exercised.
    out = rnn_forward(x, params, time_chunk=4)
    out = jax.block_until_ready(out)

    ref = reference_forward(x, params)
    assert out.shape == (B, OUTPUT)
    assert jnp.allclose(out, ref, atol=1e-5, rtol=1e-5), (out, ref)
    print("KERNEL_OK")
</pallas_src>

<mosaic_0001>
module attributes {stable_mosaic.version = 11 : i64} {
  func.func @_rnn_kernel(%arg0: i32, %arg1: memref<4x8x128xf32, #tpu.memory_space<vmem>>, %arg2: memref<128x128xf32, #tpu.memory_space<vmem>>, %arg3: memref<256x128xf32, #tpu.memory_space<vmem>>, %arg4: memref<8x128xf32, #tpu.memory_space<vmem>>, %arg5: memref<128x128xf32, #tpu.memory_space<vmem>>, %arg6: memref<8x128xf32, #tpu.memory_space<vmem>>, %arg7: memref<8x128xf32, #tpu.memory_space<vmem>>, %arg8: memref<8x128xf32, #tpu.memory_space<vmem>>, %arg9: memref<8x128xf32, #tpu.memory_space<vmem>>) attributes {dimension_semantics = [#tpu.dimension_semantics<arbitrary>], iteration_bounds = array<i64: 2>, scalar_prefetch = 0 : i64, scratch_operands = 2 : i64, tpu.core_type = #tpu.core_type<tc>, window_params = [{transform_indices = @transform_0, window_bounds = array<i64: 4, 8, 128>}, {pipeline_mode = #tpu.pipeline_mode<synchronous>, transform_indices = @transform_1, window_bounds = array<i64: 128, 128>}, {pipeline_mode = #tpu.pipeline_mode<synchronous>, transform_indices = @transform_2, window_bounds = array<i64: 256, 128>}, {pipeline_mode = #tpu.pipeline_mode<synchronous>, transform_indices = @transform_3, window_bounds = array<i64: 8, 128>}, {pipeline_mode = #tpu.pipeline_mode<synchronous>, transform_indices = @transform_4, window_bounds = array<i64: 128, 128>}, {pipeline_mode = #tpu.pipeline_mode<synchronous>, transform_indices = @transform_5, window_bounds = array<i64: 8, 128>}, {pipeline_mode = #tpu.pipeline_mode<synchronous>, transform_indices = @transform_6, window_bounds = array<i64: 8, 128>}]} {
    %c0_i32 = arith.constant 0 : i32
    %0 = arith.cmpi eq, %arg0, %c0_i32 : i32
    %1 = arith.extui %0 : i1 to i32
    %c0_i32_0 = arith.constant 0 : i32
    %2 = arith.cmpi ne, %1, %c0_i32_0 : i32
    scf.if %2 {
      %cst_36 = arith.constant 0.000000e+00 : f32
      %61 = vector.broadcast %cst_36 : f32 to vector<8x128xf32>
      %c0_37 = arith.constant 0 : index
      %c0_38 = arith.constant 0 : index
      %62 = vector.load %arg8[%c0_37, %c0_38] : memref<8x128xf32, #tpu.memory_space<vmem>>, vector<8x128xf32>
      tpu.vector_store %arg8[%c0_37, %c0_38], %61 {strides = array<i32>} : memref<8x128xf32, #tpu.memory_space<vmem>>, vector<8x128xf32>,
      %cst_39 = arith.constant 0.000000e+00 : f32
      %63 = vector.broadcast %cst_39 : f32 to vector<8x128xf32>
      %c0_40 = arith.constant 0 : index
      %c0_41 = arith.constant 0 : index
      %64 = vector.load %arg9[%c0_40, %c0_41] : memref<8x128xf32, #tpu.memory_space<vmem>>, vector<8x128xf32>
      tpu.vector_store %arg9[%c0_40, %c0_41], %63 {strides = array<i32>} : memref<8x128xf32, #tpu.memory_space<vmem>>, vector<8x128xf32>,
    } else {
    }
    %c0 = arith.constant 0 : index
    %c0_1 = arith.constant 0 : index
    %3 = vector.load %arg2[%c0, %c0_1] : memref<128x128xf32, #tpu.memory_space<vmem>>, vector<128x128xf32>
    %c0_2 = arith.constant 0 : index
    %c0_3 = arith.constant 0 : index
    %4 = vector.load %arg3[%c0_2, %c0_3] : memref<256x128xf32, #tpu.memory_space<vmem>>, vector<256x128xf32>
    %c0_4 = arith.constant 0 : index
    %c0_5 = arith.constant 0 : index
    %5 = vector.load %arg4[%c0_4, %c0_5] : memref<8x128xf32, #tpu.memory_space<vmem>>, vector<8x128xf32>
    %c0_6 = arith.constant 0 : index
    %c0_7 = arith.constant 0 : index
    %6 = vector.load %arg8[%c0_6, %c0_7] : memref<8x128xf32, #tpu.memory_space<vmem>>, vector<8x128xf32>
    %c0_8 = arith.constant 0 : index
    %c0_9 = arith.constant 0 : index
    %7 = vector.load %arg9[%c0_8, %c0_9] : memref<8x128xf32, #tpu.memory_space<vmem>>, vector<8x128xf32>
    %c0_i32_10 = arith.constant 0 : i32
    %8 = arith.index_cast %c0_i32_10 : i32 to index
    %c0_11 = arith.constant 0 : index
    %c0_12 = arith.constant 0 : index
    %9 = vector.load %arg1[%8, %c0_11, %c0_12] : memref<4x8x128xf32, #tpu.memory_space<vmem>>, vector<1x8x128xf32>
    %10 = vector.shape_cast %9 : vector<1x8x128xf32> to vector<8x128xf32>
    %cst = arith.constant dense<0.000000e+00> : vector<8x128xf32>
    %11 = tpu.matmul %6, %3, %cst {dimension_numbers = #tpu.dot_dimension_numbers<[1], [0], [0], [1], [0, 0, 1, 1], [], []>} : vector<8x128xf32>, vector<128x128xf32>, vector<8x128xf32> -> vector<8x128xf32>
    %12 = arith.addf %10, %11 : vector<8x128xf32>
    %13 = math.tanh %12 : vector<8x128xf32>
    %cst_13 = arith.constant 0.000000e+00 : f32
    %14 = vector.broadcast %cst_13 : f32 to vector<8x128xf32>
    %15 = arith.maximumf %13, %14 : vector<8x128xf32>
    %16 = tpu.concatenate %15, %7 in 1 : vector<8x128xf32>, vector<8x128xf32> -> vector<8x256xf32>
    %cst_14 = arith.constant dense<0.000000e+00> : vector<8x128xf32>
    %17 = tpu.matmul %16, %4, %cst_14 {dimension_numbers = #tpu.dot_dimension_numbers<[1], [0], [0], [1], [0, 0, 1, 1], [], []>} : vector<8x256xf32>, vector<256x128xf32>, vector<8x128xf32> -> vector<8x128xf32>
    %18 = arith.addf %17, %5 : vector<8x128xf32>
    %19 = math.tanh %18 : vector<8x128xf32>
    %c1_i32 = arith.constant 1 : i32
    %20 = arith.index_cast %c1_i32 : i32 to index
    %c0_15 = arith.constant 0 : index
    %c0_16 = arith.constant 0 : index
    %21 = vector.load %arg1[%20, %c0_15, %c0_16] : memref<4x8x128xf32, #tpu.memory_space<vmem>>, vector<1x8x128xf32>
    %22 = vector.shape_cast %21 : vector<1x8x128xf32> to vector<8x128xf32>
    %cst_17 = arith.constant dense<0.000000e+00> : vector<8x128xf32>
    %23 = tpu.matmul %13, %3, %cst_17 {dimension_numbers = #tpu.dot_dimension_numbers<[1], [0], [0], [1], [0, 0, 1, 1], [], []>} : vector<8x128xf32>, vector<128x128xf32>, vector<8x128xf32> -> vector<8x128xf32>
    %24 = arith.addf %22, %23 : vector<8x128xf32>
    %25 = math.tanh %24 : vector<8x128xf32>
    %cst_18 = arith.constant 0.000000e+00 : f32
    %26 = vector.broadcast %cst_18 : f32 to vector<8x128xf32>
    %27 = arith.maximumf %25, %26 : vector<8x128xf32>
    %28 = tpu.concatenate %27, %19 in 1 : vector<8x128xf32>, vector<8x128xf32> -> vector<8x256xf32>
    %cst_19 = arith.constant dense<0.000000e+00> : vector<8x128xf32>
    %29 = tpu.matmul %28, %4, %cst_19 {dimension_numbers = #tpu.dot_dimension_numbers<[1], [0], [0], [1], [0, 0, 1, 1], [], []>} : vector<8x256xf32>, vector<256x128xf32>, vector<8x128xf32> -> vector<8x128xf32>
    %30 = arith.addf %29, %5 : vector<8x128xf32>
    %31 = math.tanh %30 : vector<8x128xf32>
    %c2_i32 = arith.constant 2 : i32
    %32 = arith.index_cast %c2_i32 : i32 to index
    %c0_20 = arith.constant 0 : index
    %c0_21 = arith.constant 0 : index
    %33 = vector.load %arg1[%32, %c0_20, %c0_21] : memref<4x8x128xf32, #tpu.memory_space<vmem>>, vector<1x8x128xf32>
    %34 = vector.shape_cast %33 : vector<1x8x128xf32> to vector<8x128xf32>
    %cst_22 = arith.constant dense<0.000000e+00> : vector<8x128xf32>
    %35 = tpu.matmul %25, %3, %cst_22 {dimension_numbers = #tpu.dot_dimension_numbers<[1], [0], [0], [1], [0, 0, 1, 1], [], []>} : vector<8x128xf32>, vector<128x128xf32>, vector<8x128xf32> -> vector<8x128xf32>
    %36 = arith.addf %34, %35 : vector<8x128xf32>
    %37 = math.tanh %36 : vector<8x128xf32>
    %cst_23 = arith.constant 0.000000e+00 : f32
    %38 = vector.broadcast %cst_23 : f32 to vector<8x128xf32>
    %39 = arith.maximumf %37, %38 : vector<8x128xf32>
    %40 = tpu.concatenate %39, %31 in 1 : vector<8x128xf32>, vector<8x128xf32> -> vector<8x256xf32>
    %cst_24 = arith.constant dense<0.000000e+00> : vector<8x128xf32>
    %41 = tpu.matmul %40, %4, %cst_24 {dimension_numbers = #tpu.dot_dimension_numbers<[1], [0], [0], [1], [0, 0, 1, 1], [], []>} : vector<8x256xf32>, vector<256x128xf32>, vector<8x128xf32> -> vector<8x128xf32>
    %42 = arith.addf %41, %5 : vector<8x128xf32>
    %43 = math.tanh %42 : vector<8x128xf32>
    %c3_i32 = arith.constant 3 : i32
    %44 = arith.index_cast %c3_i32 : i32 to index
    %c0_25 = arith.constant 0 : index
    %c0_26 = arith.constant 0 : index
    %45 = vector.load %arg1[%44, %c0_25, %c0_26] : memref<4x8x128xf32, #tpu.memory_space<vmem>>, vector<1x8x128xf32>
    %46 = vector.shape_cast %45 : vector<1x8x128xf32> to vector<8x128xf32>
    %cst_27 = arith.constant dense<0.000000e+00> : vector<8x128xf32>
    %47 = tpu.matmul %37, %3, %cst_27 {dimension_numbers = #tpu.dot_dimension_numbers<[1], [0], [0], [1], [0, 0, 1, 1], [], []>} : vector<8x128xf32>, vector<128x128xf32>, vector<8x128xf32> -> vector<8x128xf32>
    %48 = arith.addf %46, %47 : vector<8x128xf32>
    %49 = math.tanh %48 : vector<8x128xf32>
    %cst_28 = arith.constant 0.000000e+00 : f32
    %50 = vector.broadcast %cst_28 : f32 to vector<8x128xf32>
    %51 = arith.maximumf %49, %50 : vector<8x128xf32>
    %52 = tpu.concatenate %51, %43 in 1 : vector<8x128xf32>, vector<8x128xf32> -> vector<8x256xf32>
    %cst_29 = arith.constant dense<0.000000e+00> : vector<8x128xf32>
    %53 = tpu.matmul %52, %4, %cst_29 {dimension_numbers = #tpu.dot_dimension_numbers<[1], [0], [0], [1], [0, 0, 1, 1], [], []>} : vector<8x256xf32>, vector<256x128xf32>, vector<8x128xf32> -> vector<8x128xf32>
    %54 = arith.addf %53, %5 : vector<8x128xf32>
    %55 = math.tanh %54 : vector<8x128xf32>
    %c4_i32 = arith.constant 4 : i32
    %c0_30 = arith.constant 0 : index
    %c0_31 = arith.constant 0 : index
    %56 = vector.load %arg8[%c0_30, %c0_31] : memref<8x128xf32, #tpu.memory_space<vmem>>, vector<8x128xf32>
    tpu.vector_store %arg8[%c0_30, %c0_31], %49 {strides = array<i32>} : memref<8x128xf32, #tpu.memory_space<vmem>>, vector<8x128xf32>,
    %c0_32 = arith.constant 0 : index
    %c0_33 = arith.constant 0 : index
    %57 = vector.load %arg9[%c0_32, %c0_33] : memref<8x128xf32, #tpu.memory_space<vmem>>, vector<8x128xf32>
    tpu.vector_store %arg9[%c0_32, %c0_33], %55 {strides = array<i32>} : memref<8x128xf32, #tpu.memory_space<vmem>>, vector<8x128xf32>,
    %c1_i32_34 = arith.constant 1 : i32
    %58 = arith.cmpi eq, %arg0, %c1_i32_34 : i32
    %59 = arith.extui %58 : i1 to i32
    %c0_i32_35 = arith.constant 0 : i32
    %60 = arith.cmpi ne, %59, %c0_i32_35 : i32
    scf.if %60 {
      %cst_36 = arith.constant 0.000000e+00 : f32
      %61 = vector.broadcast %cst_36 : f32 to vector<8x128xf32>
      %62 = arith.maximumf %55, %61 : vector<8x128xf32>
      %c0_37 = arith.constant 0 : index
      %c0_38 = arith.constant 0 : index
      %63 = vector.load %arg5[%c0_37, %c0_38] : memref<128x128xf32, #tpu.memory_space<vmem>>, vector<128x128xf32>
      %cst_39 = arith.constant dense<0.000000e+00> : vector<8x128xf32>
      %64 = tpu.matmul %62, %63, %cst_39 {dimension_numbers = #tpu.dot_dimension_numbers<[1], [0], [0], [1], [0, 0, 1, 1], [], []>} : vector<8x128xf32>, vector<128x128xf32>, vector<8x128xf32> -> vector<8x128xf32>
      %c0_40 = arith.constant 0 : index
      %c0_41 = arith.constant 0 : index
      %65 = vector.load %arg6[%c0_40, %c0_41] : memref<8x128xf32, #tpu.memory_space<vmem>>, vector<8x128xf32>
      %66 = arith.addf %64, %65 : vector<8x128xf32>
      %67 = arith.negf %66 : vector<8x128xf32>
      %68 = math.exp %67 : vector<8x128xf32>
      %cst_42 = arith.constant 1.000000e+00 : f32
      %69 = vector.broadcast %cst_42 : f32 to vector<8x128xf32>
      %70 = arith.addf %69, %68 : vector<8x128xf32>
      %71 = arith.divf %69, %70 : vector<8x128xf32>
      %c0_43 = arith.constant 0 : index
      %c0_44 = arith.constant 0 : index
      %72 = vector.load %arg7[%c0_43, %c0_44] : memref<8x128xf32, #tpu.memory_space<vmem>>, vector<8x128xf32>
      tpu.vector_store %arg7[%c0_43, %c0_44], %71 {strides = array<i32>} : memref<8x128xf32, #tpu.memory_space<vmem>>, vector<8x128xf32>,
    } else {
    }
    return
  }
  func.func @transform_0(%arg0: i32) -> (i32, i32, i32) {
    %c0_i32 = arith.constant 0 : i32
    %c0_i32_0 = arith.constant 0 : i32
    %c0_i32_1 = arith.constant 0 : i32
    return %arg0, %c0_i32, %c0_i32_0 : i32, i32, i32
  }
  func.func @transform_1(%arg0: i32) -> (i32, i32) {
    %c0_i32 = arith.constant 0 : i32
    %c0_i32_0 = arith.constant 0 : i32
    %c0_i32_1 = arith.constant 0 : i32
    return %c0_i32, %c0_i32_0 : i32, i32
  }
  func.func @transform_2(%arg0: i32) -> (i32, i32) {
    %c0_i32 = arith.constant 0 : i32
    %c0_i32_0 = arith.constant 0 : i32
    %c0_i32_1 = arith.constant 0 : i32
    return %c0_i32, %c0_i32_0 : i32, i32
  }
  func.func @transform_3(%arg0: i32) -> (i32, i32) {
    %c0_i32 = arith.constant 0 : i32
    %c0_i32_0 = arith.constant 0 : i32
    %c0_i32_1 = arith.constant 0 : i32
    return %c0_i32, %c0_i32_0 : i32, i32
  }
  func.func @transform_4(%arg0: i32) -> (i32, i32) {
    %c0_i32 = arith.constant 0 : i32
    %c0_i32_0 = arith.constant 0 : i32
    %c0_i32_1 = arith.constant 0 : i32
    return %c0_i32, %c0_i32_0 : i32, i32
  }
  func.func @transform_5(%arg0: i32) -> (i32, i32) {
    %c0_i32 = arith.constant 0 : i32
    %c0_i32_0 = arith.constant 0 : i32
    %c0_i32_1 = arith.constant 0 : i32
    return %c0_i32, %c0_i32_0 : i32, i32
  }
  func.func @transform_6(%arg0: i32) -> (i32, i32) {
    %c0_i32 = arith.constant 0 : i32
    %c0_i32_0 = arith.constant 0 : i32
    %c0_i32_1 = arith.constant 0 : i32
    return %c0_i32, %c0_i32_0 : i32, i32
  }
}

</mosaic_0001>

<llo_original>
// kernel: tpu_custom_call.1
$region0: #{tpu_custom_call.1}
  #allocation0 [shape = 'u32[]', space=smem, size = 0x4, offset = 0x4, fixed_abs, tag = 'smem constant byte address 0x4 - core index']
  #allocation1 [shape = 'u32[144,128]{1,0:T(1,128)}', space=vmem, size = 0x12000, scoped, tag = 'internal scratch']
  #allocation2 [shape = 'f32[8,128]{1,0:T(8,128)}', space=vmem, size = 0x1000, scoped, tag = 'scratch operand']
  #allocation3 [shape = 'f32[8,128]{1,0:T(8,128)}', space=vmem, size = 0x1000, scoped, tag = 'scratch operand']
  %s0 = inlined_call_operand.hbm [shape: f32[8,8,128], index: 0, kind: input, shape index: {}]
  %s1 = inlined_call_operand.hbm [shape: f32[128,128], index: 1, kind: input, shape index: {}]
  %s2 = inlined_call_operand.hbm [shape: f32[256,128], index: 2, kind: input, shape index: {}]
  %s3 = inlined_call_operand.vmem [shape: f32[8,128], index: 3, kind: input, shape index: {}]
  %s4 = inlined_call_operand.hbm [shape: f32[128,128], index: 4, kind: input, shape index: {}]
  %s5 = inlined_call_operand.vmem [shape: f32[8,128], index: 5, kind: input, shape index: {}]
  %s6 = inlined_call_operand.hbm [shape: f32[8,128], index: 6, kind: output, shape index: {}]
  %s7 = sld [smem:[#allocation0]]
  $region81: #{tpu_custom_call.1} parent=0
    _
  %s9 = ssub.s32 1, %s7
  %s10 = scalar_select 0, %s9, %s7
  $region1: #{tpu_custom_call.1} parent=0
    #allocation4 [shape = 'u8[32768]{0}', space=vmem, size = 0x8000, scoped, tag = 'input window, operand 0']
    #allocation5 [shape = 's32[2]{0}', space=sflag, size = 0x8, scoped, tag = 'scoped memory for tpu_custom_call.1']
    #allocation6 [shape = 's32[2]{0}', space=sflag, size = 0x8, scoped, tag = 'scoped memory for tpu_custom_call.1']
    #allocation7 [shape = 'u8[65536]{0}', space=vmem, size = 0x10000, scoped, tag = 'input window, operand 1, single buffered']
    #allocation8 [shape = 's32[1]{0}', space=sflag, size = 0x4, scoped, tag = 'scoped memory for tpu_custom_call.1']
    #allocation9 [shape = 'u8[131072]{0}', space=vmem, size = 0x20000, scoped, tag = 'input window, operand 2, single buffered']
    #allocation10 [shape = 'u8[65536]{0}', space=vmem, size = 0x10000, scoped, tag = 'input window, operand 4, single buffered']
    #allocation11 [shape = 's32[1]{0}', space=sflag, size = 0x4, scoped, tag = 'scoped memory for tpu_custom_call.1']
    #allocation12 [shape = 'u8[4096]{0}', space=vmem, size = 0x1000, scoped, tag = 'output window, operand 0, single buffered']
    %11 = vsyncpa [#allocation5], 0
    %s12 = scalar_lea.sflag [#allocation5], 1
    %13 = vsyncpa %s12, 0
    %14 = vsyncpa [#allocation8], 0
    %15 = vsyncpa [#allocation11], 0
    %16 = vsyncpa [#allocation6], 0
    loop: start=0, step=1, limit=4
    $region2: #{tpu_custom_call.1} parent=1 // loop_pre_header
      _
    $region3: #{tpu_custom_call.1} parent=1 // loop_header
      %s18 = sphi 0, %s22
      %p19 = scmp.ge.s32.totalorder %s18, 4
      %s28 = sphi 0, %s30
      %s31 = sphi 0, %s28
      %s32 = sphi 0, %s31
      %s48 = sphi 0, %s32
      %s52 = sphi 0, %s52
      %s54 = sphi 0, %s52
      %s55 = sphi 0, %s54
      %s69 = sphi 0, %s55
      %s73 = sphi 0, %s73
      %s75 = sphi 0, %s73
      %s76 = sphi 0, %s75
      %s90 = sphi 0, %s76
      %s94 = sphi 0, %s94
      %s96 = sphi 0, %s94
      %s97 = sphi 0, %s96
      %s111 = sphi 0, %s97
      %s115 = sphi 0, %s115
      %s117 = sphi 0, %s115
      %s118 = sphi 0, %s117
      %s132 = sphi 0, %s118
      %s136 = sphi 0, %s136
      %s138 = sphi 0, %s136
      %s139 = sphi 0, %s138
      %s153 = sphi 0, %s139
      %s157 = sphi 0, %s157
      %s159 = sphi 0, %s157
      %s160 = sphi 0, %s159
      %s174 = sphi 0, %s160
    $region4: #{tpu_custom_call.1} parent=1 // loop_header_branch
      %21 = sbr.rel (%p19) target = $region8
    $region5: #{tpu_custom_call.1} parent=1 // loop_body
      %s23 = ssub.s32 %s18, 1
      %s24 = ssub.s32 %s18, 2
      %s25 = sadd.s32 %s18, 1
      %s26 = ssub.s32 %s18, %s25
      %p27 = scmp.eq.s32.totalorder %s26, 0
      %s29 = sadd.s32 %s28, 1
      %s30 = scalar_select %p27, %s28, %s29
      %p33 = pneg %p27
      %p34 = scmp.eq.s32.totalorder %s18, 1
      %p35 = por %p33, %p34
      %p36 = scmp.ne.s32.totalorder %s28, %s31
      %p37 = scmp.eq.s32.totalorder %s18, 0
      %p38 = por %p36, %p37
      %p39 = scmp.ne.s32.totalorder %s28, %s31
      %p40 = scmp.eq.s32.totalorder %s23, 1
      %p41 = por %p39, %p40
      %p42 = scmp.ne.s32.totalorder %s31, %s32
      %p43 = scmp.eq.s32.totalorder %s23, 0
      %p44 = por %p42, %p43
      %p45 = scmp.ne.s32.totalorder %s31, %s32
      %p46 = scmp.eq.s32.totalorder %s24, 1
      %p47 = por %p45, %p46
      %p49 = scmp.ne.s32.totalorder %s32, %s48
      %p50 = scmp.eq.s32.totalorder %s24, 0
      %p51 = por %p49, %p50
      %s53 = sadd.s32 %s52, 1
      %p56 = scmp.eq.s32.totalorder %s18, 1
      %p57 = scmp.ne.s32.totalorder %s52, %s54
      %p58 = scmp.eq.s32.totalorder %s18, 0
      %p59 = por %p57, %p58
      %p60 = scmp.ne.s32.totalorder %s52, %s54
      %p61 = scmp.eq.s32.totalorder %s23, 1
      %p62 = por %p60, %p61
      %p63 = scmp.ne.s32.totalorder %s54, %s55
      %p64 = scmp.eq.s32.totalorder %s23, 0
      %p65 = por %p63, %p64
      %p66 = scmp.ne.s32.totalorder %s54, %s55
      %p67 = scmp.eq.s32.totalorder %s24, 1
      %p68 = por %p66, %p67
      %p70 = scmp.ne.s32.totalorder %s55, %s69
      %p71 = scmp.eq.s32.totalorder %s24, 0
      %p72 = por %p70, %p71
      %s74 = sadd.s32 %s73, 1
      %p77 = scmp.eq.s32.totalorder %s18, 1
      %p78 = scmp.ne.s32.totalorder %s73, %s75
      %p79 = scmp.eq.s32.totalorder %s18, 0
      %p80 = por %p78, %p79
      %p81 = scmp.ne.s32.totalorder %s73, %s75
      %p82 = scmp.eq.s32.totalorder %s23, 1
      %p83 = por %p81, %p82
      %p84 = scmp.ne.s32.totalorder %s75, %s76
      %p85 = scmp.eq.s32.totalorder %s23, 0
      %p86 = por %p84, %p85
      %p87 = scmp.ne.s32.totalorder %s75, %s76
      %p88 = scmp.eq.s32.totalorder %s24, 1
      %p89 = por %p87, %p88
      %p91 = scmp.ne.s32.totalorder %s76, %s90
      %p92 = scmp.eq.s32.totalorder %s24, 0
      %p93 = por %p91, %p92
      %s95 = sadd.s32 %s94, 1
      %p98 = scmp.eq.s32.totalorder %s18, 1
      %p99 = scmp.ne.s32.totalorder %s94, %s96
      %p100 = scmp.eq.s32.totalorder %s18, 0
      %p101 = por %p99, %p100
      %p102 = scmp.ne.s32.totalorder %s94, %s96
      %p103 = scmp.eq.s32.totalorder %s23, 1
      %p104 = por %p102, %p103
      %p105 = scmp.ne.s32.totalorder %s96, %s97
      %p106 = scmp.eq.s32.totalorder %s23, 0
      %p107 = por %p105, %p106
      %p108 = scmp.ne.s32.totalorder %s96, %s97
      %p109 = scmp.eq.s32.totalorder %s24, 1
      %p110 = por %p108, %p109
      %p112 = scmp.ne.s32.totalorder %s97, %s111
      %p113 = scmp.eq.s32.totalorder %s24, 0
      %p114 = por %p112, %p113
      %s116 = sadd.s32 %s115, 1
      %p119 = scmp.eq.s32.totalorder %s18, 1
      %p120 = scmp.ne.s32.totalorder %s115, %s117
      %p121 = scmp.eq.s32.totalorder %s18, 0
      %p122 = por %p120, %p121
      %p123 = scmp.ne.s32.totalorder %s115, %s117
      %p124 = scmp.eq.s32.totalorder %s23, 1
      %p125 = por %p123, %p124
      %p126 = scmp.ne.s32.totalorder %s117, %s118
      %p127 = scmp.eq.s32.totalorder %s23, 0
      %p128 = por %p126, %p127
      %p129 = scmp.ne.s32.totalorder %s117, %s118
      %p130 = scmp.eq.s32.totalorder %s24, 1
      %p131 = por %p129, %p130
      %p133 = scmp.ne.s32.totalorder %s118, %s132
      %p134 = scmp.eq.s32.totalorder %s24, 0
      %p135 = por %p133, %p134
      %s137 = sadd.s32 %s136, 1
      %p140 = scmp.eq.s32.totalorder %s18, 1
      %p141 = scmp.ne.s32.totalorder %s136, %s138
      %p142 = scmp.eq.s32.totalorder %s18, 0
      %p143 = por %p141, %p142
      %p144 = scmp.ne.s32.totalorder %s136, %s138
      %p145 = scmp.eq.s32.totalorder %s23, 1
      %p146 = por %p144, %p145
      %p147 = scmp.ne.s32.totalorder %s138, %s139
      %p148 = scmp.eq.s32.totalorder %s23, 0
      %p149 = por %p147, %p148
      %p150 = scmp.ne.s32.totalorder %s138, %s139
      %p151 = scmp.eq.s32.totalorder %s24, 1
      %p152 = por %p150, %p151
      %p154 = scmp.ne.s32.totalorder %s139, %s153
      %p155 = scmp.eq.s32.totalorder %s24, 0
      %p156 = por %p154, %p155
      %s158 = sadd.s32 %s157, 1
      %p161 = scmp.eq.s32.totalorder %s18, 1
      %p162 = scmp.ne.s32.totalorder %s157, %s159
      %p163 = scmp.eq.s32.totalorder %s18, 0
      %p164 = por %p162, %p163
      %p165 = scmp.ne.s32.totalorder %s157, %s159
      %p166 = scmp.eq.s32.totalorder %s23, 1
      %p167 = por %p165, %p166
      %p168 = scmp.ne.s32.totalorder %s159, %s160
      %p169 = scmp.eq.s32.totalorder %s23, 0
      %p170 = por %p168, %p169
      %p171 = scmp.ne.s32.totalorder %s159, %s160
      %p172 = scmp.eq.s32.totalorder %s24, 1
      %p173 = por %p171, %p172
      %p175 = scmp.ne.s32.totalorder %s160, %s174
      %p176 = scmp.eq.s32.totalorder %s24, 0
      %p177 = por %p175, %p176
      %p178 = scmp.le.s32.totalorder 1, %s18
      %p179 = scmp.lt.s32.totalorder %s18, 3
      %p180 = pnand %p178, %p179
      %p181 = pneg %p180
      // Predicated region
      $region9: #{tpu_custom_call.1} parent=5 // pred_check
        _
      $region10: #{tpu_custom_call.1} parent=5 // pred_check_branch
        %183 = sbr.rel (%p180) target = $region12
      $region11: #{tpu_custom_call.1} parent=5 // pred_region
        %s184 = ssub.s32 %s18, 1
        // Predicated region
        $region13: #{tpu_custom_call.1} parent=11 // pred_check
          %p185 = pneg %p65
        $region14: #{tpu_custom_call.1} parent=11 // pred_check_branch
          %187 = sbr.rel (%p185) target = $region16
        $region15: #{tpu_custom_call.1} parent=11 // pred_region
          %s189 = ssub.s32 2048, 2048
          %190 = vsyncadd [#allocation8], %s189
          %s191 = sshll.u32 [#allocation7], 4
          %s192 = int_to_ptr.vmem [resolvable:$true] %s191
          %197 = dma.hbm_to_vmem [thread:$0]  %s1, 2048, %s192, [#allocation8], 128, 128, 8
        $region16: #{tpu_custom_call.1} parent=11 // pred_fallthru
          _
        // Predicated region
        $region17: #{tpu_custom_call.1} parent=11 // pred_check
          %p198 = pneg %p86
        $region18: #{tpu_custom_call.1} parent=11 // pred_check_branch
          %200 = sbr.rel (%p198) target = $region20
        $region19: #{tpu_custom_call.1} parent=11 // pred_region
          %s202 = ssub.s32 4096, 4096
          %203 = vsyncadd [#allocation8], %s202
          %s204 = sshll.u32 [#allocation9], 4
          %s205 = int_to_ptr.vmem [resolvable:$true] %s204
          %210 = dma.hbm_to_vmem [thread:$0]  %s2, 4096, %s205, [#allocation8], 128, 128, 8
        $region20: #{tpu_custom_call.1} parent=11 // pred_fallthru
          _
        // Predicated region
        $region21: #{tpu_custom_call.1} parent=11 // pred_check
          %p211 = pneg %p107
        $region22: #{tpu_custom_call.1} parent=11 // pred_check_branch
          %213 = sbr.rel (%p211) target = $region24
        $region23: #{tpu_custom_call.1} parent=11 // pred_region
          _
        $region24: #{tpu_custom_call.1} parent=11 // pred_fallthru
          _
        // Predicated region
        $region25: #{tpu_custom_call.1} parent=11 // pred_check
          %p214 = pneg %p128
        $region26: #{tpu_custom_call.1} parent=11 // pred_check_branch
          %216 = sbr.rel (%p214) target = $region28
        $region27: #{tpu_custom_call.1} parent=11 // pred_region
          %s218 = ssub.s32 2048, 2048
          %219 = vsyncadd [#allocation11], %s218
          %s220 = sshll.u32 [#allocation10], 4
          %s221 = int_to_ptr.vmem [resolvable:$true] %s220
          %226 = dma.hbm_to_vmem [thread:$0]  %s4, 2048, %s221, [#allocation11], 128, 128, 8
        $region28: #{tpu_custom_call.1} parent=11 // pred_fallthru
          _
        // Predicated region
        $region29: #{tpu_custom_call.1} parent=11 // pred_check
          %p227 = pneg %p149
        $region30: #{tpu_custom_call.1} parent=11 // pred_check_branch
          %229 = sbr.rel (%p227) target = $region32
        $region31: #{tpu_custom_call.1} parent=11 // pred_region
          _
        $region32: #{tpu_custom_call.1} parent=11 // pred_fallthru
          _
      $region12: #{tpu_custom_call.1} parent=5 // pred_fallthru
        _
      %p230 = scmp.lt.s32.totalorder %s18, 2
      // Predicated region
      $region33: #{tpu_custom_call.1} parent=5 // pred_check
        %p231 = pneg %p230
      $region34: #{tpu_custom_call.1} parent=5 // pred_check_branch
        %233 = sbr.rel (%p231) target = $region36
      $region35: #{tpu_custom_call.1} parent=5 // pred_region
        // Predicated region
        $region37: #{tpu_custom_call.1} parent=35 // pred_check
          %p234 = pneg %p38
        $region38: #{tpu_custom_call.1} parent=35 // pred_check_branch
          %236 = sbr.rel (%p234) target = $region40
        $region39: #{tpu_custom_call.1} parent=35 // pred_region
          %s237 = sand.u32 %s28, 1
          %s238 = scalar_lea.sflag [#allocation5], %s237
          %s239 = sand.u32 %s28, 1
          %s240 = smul.addr %s239, 32
          %s241 = scalar_lea.vmem [#allocation4], %s240
          %s242 = smul.u32 4, %s18
          %s244 = ssub.s32 512, 512
          %245 = vsyncadd %s238, %s244
          %s246 = smul.addr %s242, 128
          %s247 = scalar_lea.hbm %s0, %s246
          %s248 = sshll.u32 %s241, 4
          %s249 = int_to_ptr.vmem [resolvable:$true] %s248
          %254 = dma.hbm_to_vmem [thread:$0]  %s247, 512, %s249, %s238, 128, 128, 8
        $region40: #{tpu_custom_call.1} parent=35 // pred_fallthru
          _
      $region36: #{tpu_custom_call.1} parent=5 // pred_fallthru
        _
      %p255 = scmp.le.s32.totalorder 1, %s18
      %p256 = scmp.lt.s32.totalorder %s18, 3
      %p257 = pnand %p255, %p256
      %p258 = pneg %p257
      // Predicated region
      $region41: #{tpu_custom_call.1} parent=5 // pred_check
        _
      $region42: #{tpu_custom_call.1} parent=5 // pred_check_branch
        %260 = sbr.rel (%p257) target = $region44
      $region43: #{tpu_custom_call.1} parent=5 // pred_region
        %s261 = ssub.s32 %s18, 1
        %s262 = sand.u32 %s31, 1
        %s263 = scalar_lea.sflag [#allocation5], %s262
        %s264 = sand.u32 %s31, 1
        %s265 = smul.addr %s264, 32
        %s266 = scalar_lea.vmem [#allocation4], %s265
        // Predicated region
        $region45: #{tpu_custom_call.1} parent=43 // pred_check
          %p267 = pneg %p44
        $region46: #{tpu_custom_call.1} parent=43 // pred_check_branch
          %269 = sbr.rel (%p267) target = $region48
        $region47: #{tpu_custom_call.1} parent=43 // pred_region
          %270 = dma.done %s263, 512
        $region48: #{tpu_custom_call.1} parent=43 // pred_fallthru
          _
        // Predicated region
        $region49: #{tpu_custom_call.1} parent=43 // pred_check
          %p271 = pneg %p65
        $region50: #{tpu_custom_call.1} parent=43 // pred_check_branch
          %273 = sbr.rel (%p271) target = $region52
        $region51: #{tpu_custom_call.1} parent=43 // pred_region
          %274 = dma.done [#allocation8], 2048
        $region52: #{tpu_custom_call.1} parent=43 // pred_fallthru
          _
        // Predicated region
        $region53: #{tpu_custom_call.1} parent=43 // pred_check
          %p275 = pneg %p86
        $region54: #{tpu_custom_call.1} parent=43 // pred_check_branch
          %277 = sbr.rel (%p275) target = $region56
        $region55: #{tpu_custom_call.1} parent=43 // pred_region
          %278 = dma.done [#allocation8], 4096
        $region56: #{tpu_custom_call.1} parent=43 // pred_fallthru
          _
        // Predicated region
        $region57: #{tpu_custom_call.1} parent=43 // pred_check
          %p279 = pneg %p128
        $region58: #{tpu_custom_call.1} parent=43 // pred_check_branch
          %281 = sbr.rel (%p279) target = $region60
        $region59: #{tpu_custom_call.1} parent=43 // pred_region
          %282 = dma.done [#allocation11], 2048
        $region60: #{tpu_custom_call.1} parent=43 // pred_fallthru
          _
        %s283 = sand.u32 %s31, 1
        %s284 = scalar_lea.sflag [#allocation5], %s283
        %s285 = sand.u32 %s31, 1
        %s286 = smul.addr %s285, 32
        %s287 = scalar_lea.vmem [#allocation4], %s286
        %p288 = pneg %p44
        %p289 = pneg %p41
        %p290 = pneg %p65
        %p291 = pneg %p62
        %p292 = pneg %p86
        %p293 = pneg %p83
        %p294 = pneg %p107
        %p295 = pneg %p104
        %p296 = pneg %p128
        %p297 = pneg %p125
        %p298 = pneg %p149
        %p299 = pneg %p146
        %p300 = pneg %p170
        %p301 = pneg %p167
        %s302 = smul.u32 4, %s23
        %p303 = scmp.eq.s32.totalorder %s23, 0
        // Predicated region
        $region61: #{tpu_custom_call.1} parent=43 // pred_check
          %p304 = pneg %p303
        $region62: #{tpu_custom_call.1} parent=43 // pred_check_branch
          %306 = sbr.rel (%p304) target = $region64
        $region63: #{tpu_custom_call.1} parent=43 // pred_region
          %307 = vst [vmem:[#allocation2] sm:$0xff] 0.0
          %308 = vst [vmem:[#allocation3] sm:$0xff] 0.0
        $region64: #{tpu_custom_call.1} parent=43 // pred_fallthru
          _
        %v309 = vld [vmem:[#allocation7] sm:$0xff]
        %v310 = vld [vmem:[#allocation7 + $0x8] sm:$0xff]
        %v311 = vld [vmem:[#allocation7 + $0x10] sm:$0xff]
        %v312 = vld [vmem:[#allocation7 + $0x18] sm:$0xff]
        %v313 = vld [vmem:[#allocation7 + $0x20] sm:$0xff]
        %v314 = vld [vmem:[#allocation7 + $0x28] sm:$0xff]
        %v315 = vld [vmem:[#allocation7 + $0x30] sm:$0xff]
        %v316 = vld [vmem:[#allocation7 + $0x38] sm:$0xff]
        %v317 = vld [vmem:[#allocation7 + $0x40] sm:$0xff]
        %v318 = vld [vmem:[#allocation7 + $0x48] sm:$0xff]
        %v319 = vld [vmem:[#allocation7 + $0x50] sm:$0xff]
        %v320 = vld [vmem:[#allocation7 + $0x58] sm:$0xff]
        %v321 = vld [vmem:[#allocation7 + $0x60] sm:$0xff]
        %v322 = vld [vmem:[#allocation7 + $0x68] sm:$0xff]
        %v323 = vld [vmem:[#allocation7 + $0x70] sm:$0xff]
        %v324 = vld [vmem:[#allocation7 + $0x78] sm:$0xff]
        %v325 = vld [vmem:[#allocation9] sm:$0xff]
        %v326 = vld [vmem:[#allocation9 + $0x8] sm:$0xff]
        %v327 = vld [vmem:[#allocation9 + $0x10] sm:$0xff]
        %v328 = vld [vmem:[#allocation9 + $0x18] sm:$0xff]
        %v329 = vld [vmem:[#allocation9 + $0x20] sm:$0xff]
        %v330 = vld [vmem:[#allocation9 + $0x28] sm:$0xff]
        %v331 = vld [vmem:[#allocation9 + $0x30] sm:$0xff]
        %v332 = vld [vmem:[#allocation9 + $0x38] sm:$0xff]
        %v333 = vld [vmem:[#allocation9 + $0x40] sm:$0xff]
        %v334 = vld [vmem:[#allocation9 + $0x48] sm:$0xff]
        %v335 = vld [vmem:[#allocation9 + $0x50] sm:$0xff]
        %v336 = vld [vmem:[#allocation9 + $0x58] sm:$0xff]
        %v337 = vld [vmem:[#allocation9 + $0x60] sm:$0xff]
        %v338 = vld [vmem:[#allocation9 + $0x68] sm:$0xff]
        %v339 = vld [vmem:[#allocation9 + $0x70] sm:$0xff]
        %v340 = vld [vmem:[#allocation9 + $0x78] sm:$0xff]
        %v341 = vld [vmem:[#allocation9 + $0x80] sm:$0xff]
        %v342 = vld [vmem:[#allocation9 + $0x88] sm:$0xff]
        %v343 = vld [vmem:[#allocation9 + $0x90] sm:$0xff]
        %v344 = vld [vmem:[#allocation9 + $0x98] sm:$0xff]
        %v345 = vld [vmem:[#allocation9 + $0xa0] sm:$0xff]
        %v346 = vld [vmem:[#allocation9 + $0xa8] sm:$0xff]
        %v347 = vld [vmem:[#allocation9 + $0xb0] sm:$0xff]
        %v348 = vld [vmem:[#allocation9 + $0xb8] sm:$0xff]
        %v349 = vld [vmem:[#allocation9 + $0xc0] sm:$0xff]
        %v350 = vld [vmem:[#allocation9 + $0xc8] sm:$0xff]
        %v351 = vld [vmem:[#allocation9 + $0xd0] sm:$0xff]
        %v352 = vld [vmem:[#allocation9 + $0xd8] sm:$0xff]
        %v353 = vld [vmem:[#allocation9 + $0xe0] sm:$0xff]
        %v354 = vld [vmem:[#allocation9 + $0xe8] sm:$0xff]
        %v355 = vld [vmem:[#allocation9 + $0xf0] sm:$0xff]
        %v356 = vld [vmem:[#allocation9 + $0xf8] sm:$0xff]
        %v357 = vld [vmem:[%s3] sm:$0xff]
        %v358 = vld [vmem:[#allocation2] sm:$0xff]
        %v359 = vld [vmem:[#allocation3] sm:$0xff]
        %v360 = vld [vmem:[%s266] sm:$0xff]
        %361 = vmatprep.subr.mxu0 0.0
        %362 = vmatpush1.msra.mxu0 %v309
        %363 = vmatprep.subr.mxu0 0.0
        %364 = vmatpush1.msra.mxu0 %v310
        %365 = vmatprep.subr.mxu0 0.0
        %366 = vmatpush1.msra.mxu0 %v311
        %367 = vmatprep.subr.mxu0 0.0
        %368 = vmatpush1.msra.mxu0 %v312
        %369 = vmatprep.subr.mxu0 0.0
        %370 = vmatpush1.msra.mxu0 %v313
        %371 = vmatprep.subr.mxu0 0.0
        %372 = vmatpush1.msra.mxu0 %v314
        %373 = vmatprep.subr.mxu0 0.0
        %374 = vmatpush1.msra.mxu0 %v315
        %375 = vmatprep.subr.mxu0 0.0
        %376 = vmatpush1.msra.mxu0 %v316
        %377 = vmatprep.subr.mxu0 0.0
        %378 = vmatpush1.msra.mxu0 %v317
        %379 = vmatprep.subr.mxu0 0.0
        %380 = vmatpush1.msra.mxu0 %v318
        %381 = vmatprep.subr.mxu0 0.0
        %382 = vmatpush1.msra.mxu0 %v319
        %383 = vmatprep.subr.mxu0 0.0
        %384 = vmatpush1.msra.mxu0 %v320
        %385 = vmatprep.subr.mxu0 0.0
        %386 = vmatpush1.msra.mxu0 %v321
        %387 = vmatprep.subr.mxu0 0.0
        %388 = vmatpush1.msra.mxu0 %v322
        %389 = vmatprep.subr.mxu0 0.0
        %390 = vmatpush1.msra.mxu0 %v323
        %391 = vmatprep.subr.mxu0 0.0
        %392 = vmatpush1.msra.mxu0 %v324
        %393 = vmatprep.subr.mxu0 0.0
        %394 = vmatpush1.msra.mxu0 0.0
        %395 = vmatprep.subr.mxu0 0.0
        %396 = vmatpush1.msra.mxu0 0.0
        %397 = vmatprep.subr.mxu0 0.0
        %398 = vmatpush1.msra.mxu0 0.0
        %399 = vmatprep.subr.mxu0 0.0
        %400 = vmatpush1.msra.mxu0 0.0
        %401 = vmatprep.subr.mxu0 0.0
        %402 = vmatpush1.msra.mxu0 0.0
        %403 = vmatprep.subr.mxu0 0.0
        %404 = vmatpush1.msra.mxu0 0.0
        %405 = vmatprep.subr.mxu0 0.0
        %406 = vmatpush1.msra.mxu0 0.0
        %407 = vmatprep.subr.mxu0 0.0
        %408 = vmatpush1.msra.mxu0 0.0
        %409 = vmatprep.subr.mxu0 0.0
        %410 = vmatpush1.msra.mxu0 0.0
        %411 = vmatprep.subr.mxu0 0.0
        %412 = vmatpush1.msra.mxu0 0.0
        %413 = vmatprep.subr.mxu0 0.0
        %414 = vmatpush1.msra.mxu0 0.0
        %415 = vmatprep.subr.mxu0 0.0
        %416 = vmatpush1.msra.mxu0 0.0
        %417 = vmatprep.subr.mxu0 0.0
        %418 = vmatpush1.msra.mxu0 0.0
        %419 = vmatprep.subr.mxu0 0.0
        %420 = vmatpush1.msra.mxu0 0.0
        %421 = vmatprep.subr.mxu0 0.0
        %422 = vmatpush1.msra.mxu0 0.0
        %423 = vmatprep.subr.mxu0 0.0
        %424 = vmatpush1.msra.mxu0 0.0
        %425 = vmatprep.mubr.f32.mxu0 0.0
        %426 = vmatmul.mubr.f32.gmra.mrb[0].mxu0 %v358
        %v427 = vpop.f32.mrb[0].mxu0
        %v428 = vadd.f32 0.0, %v427
        %v429 = vpop.f32.mrb[0].mxu0
        %430 = vdwg.mxu0
        %v431 = vadd.f32 %v360, %v428
        %v432 = vtanh.pop %v431
        %v433 = vmax.f32 %v432, 0.0
        %434 = vmatprep.subr.mxu0 0.0
        %435 = vmatpush1.msra.mxu0 %v325
        %436 = vmatprep.subr.mxu0 0.0
        %437 = vmatpush1.msra.mxu0 %v326
        %438 = vmatprep.subr.mxu0 0.0
        %439 = vmatpush1.msra.mxu0 %v327
        %440 = vmatprep.subr.mxu0 0.0
        %441 = vmatpush1.msra.mxu0 %v328
        %442 = vmatprep.subr.mxu0 0.0
        %443 = vmatpush1.msra.mxu0 %v329
        %444 = vmatprep.subr.mxu0 0.0
        %445 = vmatpush1.msra.mxu0 %v330
        %446 = vmatprep.subr.mxu0 0.0
        %447 = vmatpush1.msra.mxu0 %v331
        %448 = vmatprep.subr.mxu0 0.0
        %449 = vmatpush1.msra.mxu0 %v332
        %450 = vmatprep.subr.mxu0 0.0
        %451 = vmatpush1.msra.mxu0 %v333
        %452 = vmatprep.subr.mxu0 0.0
        %453 = vmatpush1.msra.mxu0 %v334
        %454 = vmatprep.subr.mxu0 0.0
        %455 = vmatpush1.msra.mxu0 %v335
        %456 = vmatprep.subr.mxu0 0.0
        %457 = vmatpush1.msra.mxu0 %v336
        %458 = vmatprep.subr.mxu0 0.0
        %459 = vmatpush1.msra.mxu0 %v337
        %460 = vmatprep.subr.mxu0 0.0
        %461 = vmatpush1.msra.mxu0 %v338
        %462 = vmatprep.subr.mxu0 0.0
        %463 = vmatpush1.msra.mxu0 %v339
        %464 = vmatprep.subr.mxu0 0.0
        %465 = vmatpush1.msra.mxu0 %v340
        %466 = vmatprep.subr.mxu0 0.0
        %467 = vmatpush1.msra.mxu0 %v341
        %468 = vmatprep.subr.mxu0 0.0
        %469 = vmatpush1.msra.mxu0 %v342
        %470 = vmatprep.subr.mxu0 0.0
        %471 = vmatpush1.msra.mxu0 %v343
        %472 = vmatprep.subr.mxu0 0.0
        %473 = vmatpush1.msra.mxu0 %v344
        %474 = vmatprep.subr.mxu0 0.0
        %475 = vmatpush1.msra.mxu0 %v345
        %476 = vmatprep.subr.mxu0 0.0
        %477 = vmatpush1.msra.mxu0 %v346
        %478 = vmatprep.subr.mxu0 0.0
        %479 = vmatpush1.msra.mxu0 %v347
        %480 = vmatprep.subr.mxu0 0.0
        %481 = vmatpush1.msra.mxu0 %v348
        %482 = vmatprep.subr.mxu0 0.0
        %483 = vmatpush1.msra.mxu0 %v349
        %484 = vmatprep.subr.mxu0 0.0
        %485 = vmatpush1.msra.mxu0 %v350
        %486 = vmatprep.subr.mxu0 0.0
        %487 = vmatpush1.msra.mxu0 %v351
        %488 = vmatprep.subr.mxu0 0.0
        %489 = vmatpush1.msra.mxu0 %v352
        %490 = vmatprep.subr.mxu0 0.0
        %491 = vmatpush1.msra.mxu0 %v353
        %492 = vmatprep.subr.mxu0 0.0
        %493 = vmatpush1.msra.mxu0 %v354
        %494 = vmatprep.subr.mxu0 0.0
        %495 = vmatpush1.msra.mxu0 %v355
        %496 = vmatprep.subr.mxu0 0.0
        %497 = vmatpush1.msra.mxu0 %v356
        %498 = vmatprep.mubr.f32.mxu0 %v359
        %499 = vmatmul.mubr.f32.gmra.mrb[0].mxu0 %v433
        %v500 = vpop.f32.mrb[0].mxu0
        %v501 = vadd.f32 %v357, %v500
        %v502 = vpop.f32.mrb[0].mxu0
        %503 = vdwg.mxu0
        %v504 = vtanh.pop %v501
        %s505 = scalar_lea.vmem %s266, 8 [#allocation4]
        %v506 = vld [vmem:[%s505] sm:$0xff]
        %507 = vmatprep.subr.mxu0 0.0
        %508 = vmatpush1.msra.mxu0 %v309
        %509 = vmatprep.subr.mxu0 0.0
        %510 = vmatpush1.msra.mxu0 %v310
        %511 = vmatprep.subr.mxu0 0.0
        %512 = vmatpush1.msra.mxu0 %v311
        %513 = vmatprep.subr.mxu0 0.0
        %514 = vmatpush1.msra.mxu0 %v312
        %515 = vmatprep.subr.mxu0 0.0
        %516 = vmatpush1.msra.mxu0 %v313
        %517 = vmatprep.subr.mxu0 0.0
        %518 = vmatpush1.msra.mxu0 %v314
        %519 = vmatprep.subr.mxu0 0.0
        %520 = vmatpush1.msra.mxu0 %v315
        %521 = vmatprep.subr.mxu0 0.0
        %522 = vmatpush1.msra.mxu0 %v316
        %523 = vmatprep.subr.mxu0 0.0
        %524 = vmatpush1.msra.mxu0 %v317
        %525 = vmatprep.subr.mxu0 0.0
        %526 = vmatpush1.msra.mxu0 %v318
        %527 = vmatprep.subr.mxu0 0.0
        %528 = vmatpush1.msra.mxu0 %v319
        %529 = vmatprep.subr.mxu0 0.0
        %530 = vmatpush1.msra.mxu0 %v320
        %531 = vmatprep.subr.mxu0 0.0
        %532 = vmatpush1.msra.mxu0 %v321
        %533 = vmatprep.subr.mxu0 0.0
        %534 = vmatpush1.msra.mxu0 %v322
        %535 = vmatprep.subr.mxu0 0.0
        %536 = vmatpush1.msra.mxu0 %v323
        %537 = vmatprep.subr.mxu0 0.0
        %538 = vmatpush1.msra.mxu0 %v324
        %539 = vmatprep.subr.mxu0 0.0
        %540 = vmatpush1.msra.mxu0 0.0
        %541 = vmatprep.subr.mxu0 0.0
        %542 = vmatpush1.msra.mxu0 0.0
        %543 = vmatprep.subr.mxu0 0.0
        %544 = vmatpush1.msra.mxu0 0.0
        %545 = vmatprep.subr.mxu0 0.0
        %546 = vmatpush1.msra.mxu0 0.0
        %547 = vmatprep.subr.mxu0 0.0
        %548 = vmatpush1.msra.mxu0 0.0
        %549 = vmatprep.subr.mxu0 0.0
        %550 = vmatpush1.msra.mxu0 0.0
        %551 = vmatprep.subr.mxu0 0.0
        %552 = vmatpush1.msra.mxu0 0.0
        %553 = vmatprep.subr.mxu0 0.0
        %554 = vmatpush1.msra.mxu0 0.0
        %555 = vmatprep.subr.mxu0 0.0
        %556 = vmatpush1.msra.mxu0 0.0
        %557 = vmatprep.subr.mxu0 0.0
        %558 = vmatpush1.msra.mxu0 0.0
        %559 = vmatprep.subr.mxu0 0.0
        %560 = vmatpush1.msra.mxu0 0.0
        %561 = vmatprep.subr.mxu0 0.0
        %562 = vmatpush1.msra.mxu0 0.0
        %563 = vmatprep.subr.mxu0 0.0
        %564 = vmatpush1.msra.mxu0 0.0
        %565 = vmatprep.subr.mxu0 0.0
        %566 = vmatpush1.msra.mxu0 0.0
        %567 = vmatprep.subr.mxu0 0.0
        %568 = vmatpush1.msra.mxu0 0.0
        %569 = vmatprep.subr.mxu0 0.0
        %570 = vmatpush1.msra.mxu0 0.0
        %571 = vmatprep.mubr.f32.mxu0 0.0
        %572 = vmatmul.mubr.f32.gmra.mrb[0].mxu0 %v432
        %v573 = vpop.f32.mrb[0].mxu0
        %v574 = vadd.f32 0.0, %v573
        %v575 = vpop.f32.mrb[0].mxu0
        %576 = vdwg.mxu0
        %v577 = vadd.f32 %v506, %v574
        %v578 = vtanh.pop %v577
        %v579 = vmax.f32 %v578, 0.0
        %580 = vmatprep.subr.mxu0 0.0
        %581 = vmatpush1.msra.mxu0 %v325
        %582 = vmatprep.subr.mxu0 0.0
        %583 = vmatpush1.msra.mxu0 %v326
        %584 = vmatprep.subr.mxu0 0.0
        %585 = vmatpush1.msra.mxu0 %v327
        %586 = vmatprep.subr.mxu0 0.0
        %587 = vmatpush1.msra.mxu0 %v328
        %588 = vmatprep.subr.mxu0 0.0
        %589 = vmatpush1.msra.mxu0 %v329
        %590 = vmatprep.subr.mxu0 0.0
        %591 = vmatpush1.msra.mxu0 %v330
        %592 = vmatprep.subr.mxu0 0.0
        %593 = vmatpush1.msra.mxu0 %v331
        %594 = vmatprep.subr.mxu0 0.0
        %595 = vmatpush1.msra.mxu0 %v332
        %596 = vmatprep.subr.mxu0 0.0
        %597 = vmatpush1.msra.mxu0 %v333
        %598 = vmatprep.subr.mxu0 0.0
        %599 = vmatpush1.msra.mxu0 %v334
        %600 = vmatprep.subr.mxu0 0.0
        %601 = vmatpush1.msra.mxu0 %v335
        %602 = vmatprep.subr.mxu0 0.0
        %603 = vmatpush1.msra.mxu0 %v336
        %604 = vmatprep.subr.mxu0 0.0
        %605 = vmatpush1.msra.mxu0 %v337
        %606 = vmatprep.subr.mxu0 0.0
        %607 = vmatpush1.msra.mxu0 %v338
        %608 = vmatprep.subr.mxu0 0.0
        %609 = vmatpush1.msra.mxu0 %v339
        %610 = vmatprep.subr.mxu0 0.0
        %611 = vmatpush1.msra.mxu0 %v340
        %612 = vmatprep.subr.mxu0 0.0
        %613 = vmatpush1.msra.mxu0 %v341
        %614 = vmatprep.subr.mxu0 0.0
        %615 = vmatpush1.msra.mxu0 %v342
        %616 = vmatprep.subr.mxu0 0.0
        %617 = vmatpush1.msra.mxu0 %v343
        %618 = vmatprep.subr.mxu0 0.0
        %619 = vmatpush1.msra.mxu0 %v344
        %620 = vmatprep.subr.mxu0 0.0
        %621 = vmatpush1.msra.mxu0 %v345
        %622 = vmatprep.subr.mxu0 0.0
        %623 = vmatpush1.msra.mxu0 %v346
        %624 = vmatprep.subr.mxu0 0.0
        %625 = vmatpush1.msra.mxu0 %v347
        %626 = vmatprep.subr.mxu0 0.0
        %627 = vmatpush1.msra.mxu0 %v348
        %628 = vmatprep.subr.mxu0 0.0
        %629 = vmatpush1.msra.mxu0 %v349
        %630 = vmatprep.subr.mxu0 0.0
        %631 = vmatpush1.msra.mxu0 %v350
        %632 = vmatprep.subr.mxu0 0.0
        %633 = vmatpush1.msra.mxu0 %v351
        %634 = vmatprep.subr.mxu0 0.0
        %635 = vmatpush1.msra.mxu0 %v352
        %636 = vmatprep.subr.mxu0 0.0
        %637 = vmatpush1.msra.mxu0 %v353
        %638 = vmatprep.subr.mxu0 0.0
        %639 = vmatpush1.msra.mxu0 %v354
        %640 = vmatprep.subr.mxu0 0.0
        %641 = vmatpush1.msra.mxu0 %v355
        %642 = vmatprep.subr.mxu0 0.0
        %643 = vmatpush1.msra.mxu0 %v356
        %644 = vmatprep.mubr.f32.mxu0 %v504
        %645 = vmatmul.mubr.f32.gmra.mrb[0].mxu0 %v579
        %v646 = vpop.f32.mrb[0].mxu0
        %v647 = vadd.f32 %v357, %v646
        %v648 = vpop.f32.mrb[0].mxu0
        %649 = vdwg.mxu0
        %v650 = vtanh.pop %v647
        %s651 = scalar_lea.vmem %s266, 16 [#allocation4]
        %v652 = vld [vmem:[%s651] sm:$0xff]
        %653 = vmatprep.subr.mxu0 0.0
        %654 = vmatpush1.msra.mxu0 %v309
        %655 = vmatprep.subr.mxu0 0.0
        %656 = vmatpush1.msra.mxu0 %v310
        %657 = vmatprep.subr.mxu0 0.0
        %658 = vmatpush1.msra.mxu0 %v311
        %659 = vmatprep.subr.mxu0 0.0
        %660 = vmatpush1.msra.mxu0 %v312
        %661 = vmatprep.subr.mxu0 0.0
        %662 = vmatpush1.msra.mxu0 %v313
        %663 = vmatprep.subr.mxu0 0.0
        %664 = vmatpush1.msra.mxu0 %v314
        %665 = vmatprep.subr.mxu0 0.0
        %666 = vmatpush1.msra.mxu0 %v315
        %667 = vmatprep.subr.mxu0 0.0
        %668 = vmatpush1.msra.mxu0 %v316
        %669 = vmatprep.subr.mxu0 0.0
        %670 = vmatpush1.msra.mxu0 %v317
        %671 = vmatprep.subr.mxu0 0.0
        %672 = vmatpush1.msra.mxu0 %v318
        %673 = vmatprep.subr.mxu0 0.0
        %674 = vmatpush1.msra.mxu0 %v319
        %675 = vmatprep.subr.mxu0 0.0
        %676 = vmatpush1.msra.mxu0 %v320
        %677 = vmatprep.subr.mxu0 0.0
        %678 = vmatpush1.msra.mxu0 %v321
        %679 = vmatprep.subr.mxu0 0.0
        %680 = vmatpush1.msra.mxu0 %v322
        %681 = vmatprep.subr.mxu0 0.0
        %682 = vmatpush1.msra.mxu0 %v323
        %683 = vmatprep.subr.mxu0 0.0
        %684 = vmatpush1.msra.mxu0 %v324
        %685 = vmatprep.subr.mxu0 0.0
        %686 = vmatpush1.msra.mxu0 0.0
        %687 = vmatprep.subr.mxu0 0.0
        %688 = vmatpush1.msra.mxu0 0.0
        %689 = vmatprep.subr.mxu0 0.0
        %690 = vmatpush1.msra.mxu0 0.0
        %691 = vmatprep.subr.mxu0 0.0
        %692 = vmatpush1.msra.mxu0 0.0
        %693 = vmatprep.subr.mxu0 0.0
        %694 = vmatpush1.msra.mxu0 0.0
        %695 = vmatprep.subr.mxu0 0.0
        %696 = vmatpush1.msra.mxu0 0.0
        %697 = vmatprep.subr.mxu0 0.0
        %698 = vmatpush1.msra.mxu0 0.0
        %699 = vmatprep.subr.mxu0 0.0
        %700 = vmatpush1.msra.mxu0 0.0
        %701 = vmatprep.subr.mxu0 0.0
        %702 = vmatpush1.msra.mxu0 0.0
        %703 = vmatprep.subr.mxu0 0.0
        %704 = vmatpush1.msra.mxu0 0.0
        %705 = vmatprep.subr.mxu0 0.0
        %706 = vmatpush1.msra.mxu0 0.0
        %707 = vmatprep.subr.mxu0 0.0
        %708 = vmatpush1.msra.mxu0 0.0
        %709 = vmatprep.subr.mxu0 0.0
        %710 = vmatpush1.msra.mxu0 0.0
        %711 = vmatprep.subr.mxu0 0.0
        %712 = vmatpush1.msra.mxu0 0.0
        %713 = vmatprep.subr.mxu0 0.0
        %714 = vmatpush1.msra.mxu0 0.0
        %715 = vmatprep.subr.mxu0 0.0
        %716 = vmatpush1.msra.mxu0 0.0
        %717 = vmatprep.mubr.f32.mxu0 0.0
        %718 = vmatmul.mubr.f32.gmra.mrb[0].mxu0 %v578
        %v719 = vpop.f32.mrb[0].mxu0
        %v720 = vadd.f32 0.0, %v719
        %v721 = vpop.f32.mrb[0].mxu0
        %722 = vdwg.mxu0
        %v723 = vadd.f32 %v652, %v720
        %v724 = vtanh.pop %v723
        %v725 = vmax.f32 %v724, 0.0
        %726 = vmatprep.subr.mxu0 0.0
        %727 = vmatpush1.msra.mxu0 %v325
        %728 = vmatprep.subr.mxu0 0.0
        %729 = vmatpush1.msra.mxu0 %v326
        %730 = vmatprep.subr.mxu0 0.0
        %731 = vmatpush1.msra.mxu0 %v327
        %732 = vmatprep.subr.mxu0 0.0
        %733 = vmatpush1.msra.mxu0 %v328
        %734 = vmatprep.subr.mxu0 0.0
        %735 = vmatpush1.msra.mxu0 %v329
        %736 = vmatprep.subr.mxu0 0.0
        %737 = vmatpush1.msra.mxu0 %v330
        %738 = vmatprep.subr.mxu0 0.0
        %739 = vmatpush1.msra.mxu0 %v331
        %740 = vmatprep.subr.mxu0 0.0
        %741 = vmatpush1.msra.mxu0 %v332
        %742 = vmatprep.subr.mxu0 0.0
        %743 = vmatpush1.msra.mxu0 %v333
        %744 = vmatprep.subr.mxu0 0.0
        %745 = vmatpush1.msra.mxu0 %v334
        %746 = vmatprep.subr.mxu0 0.0
        %747 = vmatpush1.msra.mxu0 %v335
        %748 = vmatprep.subr.mxu0 0.0
        %749 = vmatpush1.msra.mxu0 %v336
        %750 = vmatprep.subr.mxu0 0.0
        %751 = vmatpush1.msra.mxu0 %v337
        %752 = vmatprep.subr.mxu0 0.0
        %753 = vmatpush1.msra.mxu0 %v338
        %754 = vmatprep.subr.mxu0 0.0
        %755 = vmatpush1.msra.mxu0 %v339
        %756 = vmatprep.subr.mxu0 0.0
        %757 = vmatpush1.msra.mxu0 %v340
        %758 = vmatprep.subr.mxu0 0.0
        %759 = vmatpush1.msra.mxu0 %v341
        %760 = vmatprep.subr.mxu0 0.0
        %761 = vmatpush1.msra.mxu0 %v342
        %762 = vmatprep.subr.mxu0 0.0
        %763 = vmatpush1.msra.mxu0 %v343
        %764 = vmatprep.subr.mxu0 0.0
        %765 = vmatpush1.msra.mxu0 %v344
        %766 = vmatprep.subr.mxu0 0.0
        %767 = vmatpush1.msra.mxu0 %v345
        %768 = vmatprep.subr.mxu0 0.0
        %769 = vmatpush1.msra.mxu0 %v346
        %770 = vmatprep.subr.mxu0 0.0
        %771 = vmatpush1.msra.mxu0 %v347
        %772 = vmatprep.subr.mxu0 0.0
        %773 = vmatpush1.msra.mxu0 %v348
        %774 = vmatprep.subr.mxu0 0.0
        %775 = vmatpush1.msra.mxu0 %v349
        %776 = vmatprep.subr.mxu0 0.0
        %777 = vmatpush1.msra.mxu0 %v350
        %778 = vmatprep.subr.mxu0 0.0
        %779 = vmatpush1.msra.mxu0 %v351
        %780 = vmatprep.subr.mxu0 0.0
        %781 = vmatpush1.msra.mxu0 %v352
        %782 = vmatprep.subr.mxu0 0.0
        %783 = vmatpush1.msra.mxu0 %v353
        %784 = vmatprep.subr.mxu0 0.0
        %785 = vmatpush1.msra.mxu0 %v354
        %786 = vmatprep.subr.mxu0 0.0
        %787 = vmatpush1.msra.mxu0 %v355
        %788 = vmatprep.subr.mxu0 0.0
        %789 = vmatpush1.msra.mxu0 %v356
        %790 = vmatprep.mubr.f32.mxu0 %v650
        %791 = vmatmul.mubr.f32.gmra.mrb[0].mxu0 %v725
        %v792 = vpop.f32.mrb[0].mxu0
        %v793 = vadd.f32 %v357, %v792
        %v794 = vpop.f32.mrb[0].mxu0
        %795 = vdwg.mxu0
        %v796 = vtanh.pop %v793
        %s797 = scalar_lea.vmem %s266, 24 [#allocation4]
        %v798 = vld [vmem:[%s797] sm:$0xff]
        %799 = vmatprep.subr.mxu0 0.0
        %800 = vmatpush1.msra.mxu0 %v309
        %801 = vmatprep.subr.mxu0 0.0
        %802 = vmatpush1.msra.mxu0 %v310
        %803 = vmatprep.subr.mxu0 0.0
        %804 = vmatpush1.msra.mxu0 %v311
        %805 = vmatprep.subr.mxu0 0.0
        %806 = vmatpush1.msra.mxu0 %v312
        %807 = vmatprep.subr.mxu0 0.0
        %808 = vmatpush1.msra.mxu0 %v313
        %809 = vmatprep.subr.mxu0 0.0
        %810 = vmatpush1.msra.mxu0 %v314
        %811 = vmatprep.subr.mxu0 0.0
        %812 = vmatpush1.msra.mxu0 %v315
        %813 = vmatprep.subr.mxu0 0.0
        %814 = vmatpush1.msra.mxu0 %v316
        %815 = vmatprep.subr.mxu0 0.0
        %816 = vmatpush1.msra.mxu0 %v317
        %817 = vmatprep.subr.mxu0 0.0
        %818 = vmatpush1.msra.mxu0 %v318
        %819 = vmatprep.subr.mxu0 0.0
        %820 = vmatpush1.msra.mxu0 %v319
        %821 = vmatprep.subr.mxu0 0.0
        %822 = vmatpush1.msra.mxu0 %v320
        %823 = vmatprep.subr.mxu0 0.0
        %824 = vmatpush1.msra.mxu0 %v321
        %825 = vmatprep.subr.mxu0 0.0
        %826 = vmatpush1.msra.mxu0 %v322
        %827 = vmatprep.subr.mxu0 0.0
        %828 = vmatpush1.msra.mxu0 %v323
        %829 = vmatprep.subr.mxu0 0.0
        %830 = vmatpush1.msra.mxu0 %v324
        %831 = vmatprep.subr.mxu0 0.0
        %832 = vmatpush1.msra.mxu0 0.0
        %833 = vmatprep.subr.mxu0 0.0
        %834 = vmatpush1.msra.mxu0 0.0
        %835 = vmatprep.subr.mxu0 0.0
        %836 = vmatpush1.msra.mxu0 0.0
        %837 = vmatprep.subr.mxu0 0.0
        %838 = vmatpush1.msra.mxu0 0.0
        %839 = vmatprep.subr.mxu0 0.0
        %840 = vmatpush1.msra.mxu0 0.0
        %841 = vmatprep.subr.mxu0 0.0
        %842 = vmatpush1.msra.mxu0 0.0
        %843 = vmatprep.subr.mxu0 0.0
        %844 = vmatpush1.msra.mxu0 0.0
        %845 = vmatprep.subr.mxu0 0.0
        %846 = vmatpush1.msra.mxu0 0.0
        %847 = vmatprep.subr.mxu0 0.0
        %848 = vmatpush1.msra.mxu0 0.0
        %849 = vmatprep.subr.mxu0 0.0
        %850 = vmatpush1.msra.mxu0 0.0
        %851 = vmatprep.subr.mxu0 0.0
        %852 = vmatpush1.msra.mxu0 0.0
        %853 = vmatprep.subr.mxu0 0.0
        %854 = vmatpush1.msra.mxu0 0.0
        %855 = vmatprep.subr.mxu0 0.0
        %856 = vmatpush1.msra.mxu0 0.0
        %857 = vmatprep.subr.mxu0 0.0
        %858 = vmatpush1.msra.mxu0 0.0
        %859 = vmatprep.subr.mxu0 0.0
        %860 = vmatpush1.msra.mxu0 0.0
        %861 = vmatprep.subr.mxu0 0.0
        %862 = vmatpush1.msra.mxu0 0.0
        %863 = vmatprep.mubr.f32.mxu0 0.0
        %864 = vmatmul.mubr.f32.gmra.mrb[0].mxu0 %v724
        %v865 = vpop.f32.mrb[0].mxu0
        %v866 = vadd.f32 0.0, %v865
        %v867 = vpop.f32.mrb[0].mxu0
        %868 = vdwg.mxu0
        %v869 = vadd.f32 %v798, %v866
        %v870 = vtanh.pop %v869
        %v871 = vmax.f32 %v870, 0.0
        %872 = vmatprep.subr.mxu0 0.0
        %873 = vmatpush1.msra.mxu0 %v325
        %874 = vmatprep.subr.mxu0 0.0
        %875 = vmatpush1.msra.mxu0 %v326
        %876 = vmatprep.subr.mxu0 0.0
        %877 = vmatpush1.msra.mxu0 %v327
        %878 = vmatprep.subr.mxu0 0.0
        %879 = vmatpush1.msra.mxu0 %v328
        %880 = vmatprep.subr.mxu0 0.0
        %881 = vmatpush1.msra.mxu0 %v329
        %882 = vmatprep.subr.mxu0 0.0
        %883 = vmatpush1.msra.mxu0 %v330
        %884 = vmatprep.subr.mxu0 0.0
        %885 = vmatpush1.msra.mxu0 %v331
        %886 = vmatprep.subr.mxu0 0.0
        %887 = vmatpush1.msra.mxu0 %v332
        %888 = vmatprep.subr.mxu0 0.0
        %889 = vmatpush1.msra.mxu0 %v333
        %890 = vmatprep.subr.mxu0 0.0
        %891 = vmatpush1.msra.mxu0 %v334
        %892 = vmatprep.subr.mxu0 0.0
        %893 = vmatpush1.msra.mxu0 %v335
        %894 = vmatprep.subr.mxu0 0.0
        %895 = vmatpush1.msra.mxu0 %v336
        %896 = vmatprep.subr.mxu0 0.0
        %897 = vmatpush1.msra.mxu0 %v337
        %898 = vmatprep.subr.mxu0 0.0
        %899 = vmatpush1.msra.mxu0 %v338
        %900 = vmatprep.subr.mxu0 0.0
        %901 = vmatpush1.msra.mxu0 %v339
        %902 = vmatprep.subr.mxu0 0.0
        %903 = vmatpush1.msra.mxu0 %v340
        %904 = vmatprep.subr.mxu0 0.0
        %905 = vmatpush1.msra.mxu0 %v341
        %906 = vmatprep.subr.mxu0 0.0
        %907 = vmatpush1.msra.mxu0 %v342
        %908 = vmatprep.subr.mxu0 0.0
        %909 = vmatpush1.msra.mxu0 %v343
        %910 = vmatprep.subr.mxu0 0.0
        %911 = vmatpush1.msra.mxu0 %v344
        %912 = vmatprep.subr.mxu0 0.0
        %913 = vmatpush1.msra.mxu0 %v345
        %914 = vmatprep.subr.mxu0 0.0
        %915 = vmatpush1.msra.mxu0 %v346
        %916 = vmatprep.subr.mxu0 0.0
        %917 = vmatpush1.msra.mxu0 %v347
        %918 = vmatprep.subr.mxu0 0.0
        %919 = vmatpush1.msra.mxu0 %v348
        %920 = vmatprep.subr.mxu0 0.0
        %921 = vmatpush1.msra.mxu0 %v349
        %922 = vmatprep.subr.mxu0 0.0
        %923 = vmatpush1.msra.mxu0 %v350
        %924 = vmatprep.subr.mxu0 0.0
        %925 = vmatpush1.msra.mxu0 %v351
        %926 = vmatprep.subr.mxu0 0.0
        %927 = vmatpush1.msra.mxu0 %v352
        %928 = vmatprep.subr.mxu0 0.0
        %929 = vmatpush1.msra.mxu0 %v353
        %930 = vmatprep.subr.mxu0 0.0
        %931 = vmatpush1.msra.mxu0 %v354
        %932 = vmatprep.subr.mxu0 0.0
        %933 = vmatpush1.msra.mxu0 %v355
        %934 = vmatprep.subr.mxu0 0.0
        %935 = vmatpush1.msra.mxu0 %v356
        %936 = vmatprep.mubr.f32.mxu0 %v796
        %937 = vmatmul.mubr.f32.gmra.mrb[0].mxu0 %v871
        %v938 = vpop.f32.mrb[0].mxu0
        %v939 = vadd.f32 %v357, %v938
        %v940 = vpop.f32.mrb[0].mxu0
        %941 = vdwg.mxu0
        %v942 = vtanh.pop %v939
        %943 = vst [vmem:[#allocation2] sm:$0xff] %v870
        %944 = vst [vmem:[#allocation3] sm:$0xff] %v942
        %p945 = scmp.eq.s32.totalorder %s23, 1
        // Predicated region
        $region65: #{tpu_custom_call.1} parent=43 // pred_check
          %p946 = pneg %p945
        $region66: #{tpu_custom_call.1} parent=43 // pred_check_branch
          %948 = sbr.rel (%p946) target = $region68
        $region67: #{tpu_custom_call.1} parent=43 // pred_region
          %v949 = vmax.f32 %v942, 0.0
          %v950 = vld [vmem:[#allocation10] sm:$0xff]
          %v951 = vld [vmem:[#allocation10 + $0x8] sm:$0xff]
          %v952 = vld [vmem:[#allocation10 + $0x10] sm:$0xff]
          %v953 = vld [vmem:[#allocation10 + $0x18] sm:$0xff]
          %v954 = vld [vmem:[#allocation10 + $0x20] sm:$0xff]
          %v955 = vld [vmem:[#allocation10 + $0x28] sm:$0xff]
          %v956 = vld [vmem:[#allocation10 + $0x30] sm:$0xff]
          %v957 = vld [vmem:[#allocation10 + $0x38] sm:$0xff]
          %v958 = vld [vmem:[#allocation10 + $0x40] sm:$0xff]
          %v959 = vld [vmem:[#allocation10 + $0x48] sm:$0xff]
          %v960 = vld [vmem:[#allocation10 + $0x50] sm:$0xff]
          %v961 = vld [vmem:[#allocation10 + $0x58] sm:$0xff]
          %v962 = vld [vmem:[#allocation10 + $0x60] sm:$0xff]
          %v963 = vld [vmem:[#allocation10 + $0x68] sm:$0xff]
          %v964 = vld [vmem:[#allocation10 + $0x70] sm:$0xff]
          %v965 = vld [vmem:[#allocation10 + $0x78] sm:$0xff]
          %v966 = vld [vmem:[%s5] sm:$0xff]
          %967 = vmatprep.subr.mxu0 0.0
          %968 = vmatpush1.msra.mxu0 %v950
          %969 = vmatprep.subr.mxu0 0.0
          %970 = vmatpush1.msra.mxu0 %v951
          %971 = vmatprep.subr.mxu0 0.0
          %972 = vmatpush1.msra.mxu0 %v952
          %973 = vmatprep.subr.mxu0 0.0
          %974 = vmatpush1.msra.mxu0 %v953
          %975 = vmatprep.subr.mxu0 0.0
          %976 = vmatpush1.msra.mxu0 %v954
          %977 = vmatprep.subr.mxu0 0.0
          %978 = vmatpush1.msra.mxu0 %v955
          %979 = vmatprep.subr.mxu0 0.0
          %980 = vmatpush1.msra.mxu0 %v956
          %981 = vmatprep.subr.mxu0 0.0
          %982 = vmatpush1.msra.mxu0 %v957
          %983 = vmatprep.subr.mxu0 0.0
          %984 = vmatpush1.msra.mxu0 %v958
          %985 = vmatprep.subr.mxu0 0.0
          %986 = vmatpush1.msra.mxu0 %v959
          %987 = vmatprep.subr.mxu0 0.0
          %988 = vmatpush1.msra.mxu0 %v960
          %989 = vmatprep.subr.mxu0 0.0
          %990 = vmatpush1.msra.mxu0 %v961
          %991 = vmatprep.subr.mxu0 0.0
          %992 = vmatpush1.msra.mxu0 %v962
          %993 = vmatprep.subr.mxu0 0.0
          %994 = vmatpush1.msra.mxu0 %v963
          %995 = vmatprep.subr.mxu0 0.0
          %996 = vmatpush1.msra.mxu0 %v964
          %997 = vmatprep.subr.mxu0 0.0
          %998 = vmatpush1.msra.mxu0 %v965
          %999 = vmatprep.subr.mxu0 0.0
          %1000 = vmatpush1.msra.mxu0 0.0
          %1001 = vmatprep.subr.mxu0 0.0
          %1002 = vmatpush1.msra.mxu0 0.0
          %1003 = vmatprep.subr.mxu0 0.0
          %1004 = vmatpush1.msra.mxu0 0.0
          %1005 = vmatprep.subr.mxu0 0.0
          %1006 = vmatpush1.msra.mxu0 0.0
          %1007 = vmatprep.subr.mxu0 0.0
          %1008 = vmatpush1.msra.mxu0 0.0
          %1009 = vmatprep.subr.mxu0 0.0
          %1010 = vmatpush1.msra.mxu0 0.0
          %1011 = vmatprep.subr.mxu0 0.0
          %1012 = vmatpush1.msra.mxu0 0.0
          %1013 = vmatprep.subr.mxu0 0.0
          %1014 = vmatpush1.msra.mxu0 0.0
          %1015 = vmatprep.subr.mxu0 0.0
          %1016 = vmatpush1.msra.mxu0 0.0
          %1017 = vmatprep.subr.mxu0 0.0
          %1018 = vmatpush1.msra.mxu0 0.0
          %1019 = vmatprep.subr.mxu0 0.0
          %1020 = vmatpush1.msra.mxu0 0.0
          %1021 = vmatprep.subr.mxu0 0.0
          %1022 = vmatpush1.msra.mxu0 0.0
          %1023 = vmatprep.subr.mxu0 0.0
          %1024 = vmatpush1.msra.mxu0 0.0
          %1025 = vmatprep.subr.mxu0 0.0
          %1026 = vmatpush1.msra.mxu0 0.0
          %1027 = vmatprep.subr.mxu0 0.0
          %1028 = vmatpush1.msra.mxu0 0.0
          %1029 = vmatprep.subr.mxu0 0.0
          %1030 = vmatpush1.msra.mxu0 0.0
          %1031 = vmatprep.mubr.f32.mxu0 0.0
          %1032 = vmatmul.mubr.f32.gmra.mrb[0].mxu0 %v949
          %v1033 = vpop.f32.mrb[0].mxu0
          %v1034 = vadd.f32 %v966, %v1033
          %v1035 = vpop.f32.mrb[0].mxu0
          %1036 = vdwg.mxu0
          %v1037 = vxor.u32 %v1034, 2147483648
          %v1038 = vmul.f32 %v1037, 1.442695
          %v1039 = vpow.pop %v1038
          %v1040 = vadd.f32 %v1039, 1.0
          %v1041 = vrcp.pop %v1040
          %v1042 = vmul.f32 1.0, %v1041
          %1043 = vst [vmem:[#allocation12] sm:$0xff] %v1042
        $region68: #{tpu_custom_call.1} parent=43 // pred_fallthru
          _
        // Predicated region
        $region69: #{tpu_custom_call.1} parent=43 // pred_check
          %p1044 = pneg %p167
        $region70: #{tpu_custom_call.1} parent=43 // pred_check_branch
          %1046 = sbr.rel (%p1044) target = $region72
        $region71: #{tpu_custom_call.1} parent=43 // pred_region
          %s1048 = ssub.s32 128, 128
          %1049 = vsyncadd [#allocation6], %s1048
          %s1051 = sshll.u32 [#allocation12], 4
          %s1052 = int_to_ptr.vmem [resolvable:$true] %s1051
          %1054 = dma.vmem_to_hbm [thread:$0]  %s1052, 128, %s6, [#allocation6]
        $region72: #{tpu_custom_call.1} parent=43 // pred_fallthru
          _
        // Predicated region
        $region73: #{tpu_custom_call.1} parent=43 // pred_check
          %p1055 = pneg %p167
        $region74: #{tpu_custom_call.1} parent=43 // pred_check_branch
          %1057 = sbr.rel (%p1055) target = $region76
        $region75: #{tpu_custom_call.1} parent=43 // pred_region
          %1058 = dma.done [#allocation6], 128
        $region76: #{tpu_custom_call.1} parent=43 // pred_fallthru
          _
      $region44: #{tpu_custom_call.1} parent=5 // pred_fallthru
        _
      %p1059 = scmp.le.s32.totalorder 2, %s18
      // Predicated region
      $region77: #{tpu_custom_call.1} parent=5 // pred_check
        %p1060 = pneg %p1059
      $region78: #{tpu_custom_call.1} parent=5 // pred_check_branch
        %1062 = sbr.rel (%p1060) target = $region80
      $region79: #{tpu_custom_call.1} parent=5 // pred_region
        %s1063 = ssub.s32 %s18, 2
      $region80: #{tpu_custom_call.1} parent=5 // pred_fallthru
        _
    $region6: #{tpu_custom_call.1} parent=1 // loop_footer
      %s22 = sadd.s32 1, %s18
    $region7: #{tpu_custom_call.1} parent=1 // loop_footer_branch
      %17 = sbr.rel target = $region3
    $region8: #{tpu_custom_call.1} parent=1 // loop_exit
      _
    %1064 = vsyncpa [#allocation5], 1
    %s1065 = scalar_lea.sflag [#allocation5], 1
    %1066 = vsyncpa %s1065, 1
    %1067 = vsyncpa [#allocation8], 1
    %1068 = vsyncpa [#allocation11], 1
    %1069 = vsyncpa [#allocation6], 1
    %s1070 = scalar_lea.sflag [#allocation6], 1
    %1071 = vsyncpa %s1070, 1

</llo_original>
